<compile_context>
chip_gen: v6e
topology: v6e:2x2x1
jax: 0.10.0
libtpu: 0.0.40
codegen_flags: <defaults>
</compile_context>

<pallas_src>
import jax
import jax.numpy as jnp
from jax.experimental import pallas as pl
from jax.experimental.pallas import tpu as pltpu


LANE = 128
SUBLANE = 8


def _round_up(n, m):
    return ((n + m - 1) // m) * m


def deep_table3_kernel(x_ref, w12_ref, w3_ref, o_ref):
    # fused fc1+fc2: (bt, in) @ (in, H2) -> (bt, H2)
    h = jnp.dot(x_ref[...], w12_ref[...], preferred_element_type=jnp.float32)
    # softmax over last dim (F.softmax default on a 2-D input is dim=1)
    m = jnp.max(h, axis=-1, keepdims=True)
    e = jnp.exp(h - m)
    denom = jnp.sum(e, axis=-1, keepdims=True)
    # exact reciprocal: keeps the 1e-5 reference tolerance intact
    p = e * pl.reciprocal(denom, approx=False)
    # fc3 (zero-padded to 128 lanes): (bt, H2) @ (H2, 128) -> (bt, 128)
    o_ref[...] = jnp.dot(p, w3_ref[...], preferred_element_type=jnp.float32).astype(
        o_ref.dtype
    )


def prepare_params(w1, w2, w3):
    """One-time parameter prep (hoisted out of the forward path).

    w1: [H1, in], w2: [H2, H1], w3: [out, H2]  (PyTorch nn.Linear layout)
    Returns:
      w12      : [in, H2]      folded fc1·fc2  (x @ w1.T @ w2.T == x @ w12)
      w3t_pad  : [H2, N_pad]   fc3 weight, transposed and zero-padded to a
                               multiple of 128 output lanes (lane-dense stores)
    """
    w12 = jnp.dot(w1.T, w2.T)  # [in, H2]
    out_channels, h2 = w3.shape
    n_pad = _round_up(out_channels, LANE)
    w3t_pad = jnp.zeros((h2, n_pad), jnp.float32).at[:, :out_channels].set(w3.T)
    return jnp.asarray(w12, jnp.float32), w3t_pad


def deep_table3_forward(x, w12, w3t_pad, out_channels):
    """x: [B, in_ch]; w12/w3t_pad from prepare_params."""
    B, in_ch = x.shape
    h2, n_pad = w3t_pad.shape

    # Batch tiling: 128 rows (matches MXU M dim) for large batches, otherwise
    # round the tiny batch up to the 8-row sublane granule.
    b_tile = LANE if B >= LANE else _round_up(B, SUBLANE)
    b_pad = _round_up(B, b_tile)
    if b_pad != B:
        x = jnp.pad(x, ((0, b_pad - B), (0, 0)))

    grid = (b_pad // b_tile,)

    out = pl.pallas_call(
        deep_table3_kernel,
        out_shape=jax.ShapeDtypeStruct((b_pad, n_pad), jnp.float32),
        grid=grid,
        in_specs=[
            pl.BlockSpec((b_tile, in_ch), lambda i: (i, 0)),   # x: streamed per tile
            pl.BlockSpec((in_ch, h2), lambda i: (0, 0)),        # W12: VMEM-resident
            pl.BlockSpec((h2, n_pad), lambda i: (0, 0)),        # W3:  VMEM-resident
        ],
        out_specs=pl.BlockSpec((b_tile, n_pad), lambda i: (i, 0)),
        compiler_params=pltpu.CompilerParams(
            dimension_semantics=("parallel",),
        ),
    )(x, w12, w3t_pad)

    return out[:B, :out_channels]


def init_params(key, in_channels, out_channels, num_hidden1=200, num_hidden2=100):
    """Matches the PyTorch module's init: fc1/fc3 zeroed, fc2 default Linear init."""
    w1 = jnp.zeros((num_hidden1, in_channels), jnp.float32)
    w3 = jnp.zeros((out_channels, num_hidden2), jnp.float32)
    bound = 1.0 / (num_hidden1 ** 0.5)
    w2 = jax.random.uniform(
        key, (num_hidden2, num_hidden1), jnp.float32, minval=-bound, maxval=bound
    )
    return w1, w2, w3


if __name__ == "__main__":
    key = jax.random.PRNGKey(0)
    k_x, k_w1, k_w2, k_w3 = jax.random.split(key, 4)

    in_channels, out_channels = 32, 16
    num_hidden1, num_hidden2 = 200, 100  # module defaults

    # --- Check 1: random (non-degenerate) weights so the matmul/softmax path
    #     is actually exercised (the module's default init zeros fc1/fc3). ---
    b1 = 1.0 / (in_channels ** 0.5)
    b2 = 1.0 / (num_hidden1 ** 0.5)
    b3 = 1.0 / (num_hidden2 ** 0.5)
    w1 = jax.random.uniform(k_w1, (num_hidden1, in_channels), jnp.float32, -b1, b1)
    w2 = jax.random.uniform(k_w2, (num_hidden2, num_hidden1), jnp.float32, -b2, b2)
    w3 = jax.random.uniform(k_w3, (out_channels, num_hidden2), jnp.float32, -b3, b3)

    w12, w3t_pad = prepare_params(w1, w2, w3)

    for B in (8, 256):  # small batch (single tile) and gridded batch (2 x 128 tiles)
        x = jax.random.normal(jax.random.fold_in(k_x, B), (B, in_channels), jnp.float32)
        out = deep_table3_forward(x, w12, w3t_pad, out_channels)
        jax.block_until_ready(out)

        # Pure-JAX reference of the original (unfused) forward.
        ref = jax.nn.softmax((x @ w1.T) @ w2.T, axis=-1) @ w3.T
        assert out.shape == (B, out_channels)
        assert jnp.allclose(out, ref, atol=1e-5), f"mismatch vs reference (B={B})"

    # --- Check 2: module-default init (fc1/fc3 zeroed) -> output must be zero. ---
    w1z, w2d, w3z = init_params(jax.random.fold_in(key, 7), in_channels, out_channels)
    w12z, w3tz = prepare_params(w1z, w2d, w3z)
    xz = jax.random.normal(k_x, (8, in_channels), jnp.float32)
    outz = deep_table3_forward(xz, w12z, w3tz, out_channels)
    jax.block_until_ready(outz)
    assert jnp.allclose(outz, jnp.zeros_like(outz)), "default-init output should be zero"

    print("KERNEL_OK")
</pallas_src>

<mosaic_0001>
module attributes {stable_mosaic.version = 11 : i64} {
  func.func @deep_table3_kernel(%arg0: i32, %arg1: memref<8x32xf32, #tpu.memory_space<vmem>>, %arg2: memref<32x100xf32, #tpu.memory_space<vmem>>, %arg3: memref<100x128xf32, #tpu.memory_space<vmem>>, %arg4: memref<8x128xf32, #tpu.memory_space<vmem>>) attributes {dimension_semantics = [#tpu.dimension_semantics<parallel>], iteration_bounds = array<i64: 1>, scalar_prefetch = 0 : i64, scratch_operands = 0 : i64, tpu.core_type = #tpu.core_type<tc>, window_params = [{transform_indices = @transform_0, window_bounds = array<i64: 8, 32>}, {pipeline_mode = #tpu.pipeline_mode<synchronous>, transform_indices = @transform_1, window_bounds = array<i64: 32, 100>}, {pipeline_mode = #tpu.pipeline_mode<synchronous>, transform_indices = @transform_2, window_bounds = array<i64: 100, 128>}, {transform_indices = @transform_3, window_bounds = array<i64: 8, 128>}]} {
    %c0 = arith.constant 0 : index
    %c0_0 = arith.constant 0 : index
    %0 = vector.load %arg1[%c0, %c0_0] : memref<8x32xf32, #tpu.memory_space<vmem>>, vector<8x32xf32>
    %c0_1 = arith.constant 0 : index
    %c0_2 = arith.constant 0 : index
    %1 = vector.load %arg2[%c0_1, %c0_2] : memref<32x100xf32, #tpu.memory_space<vmem>>, vector<32x100xf32>
    %cst = arith.constant dense<0.000000e+00> : vector<8x100xf32>
    %2 = tpu.matmul %0, %1, %cst {dimension_numbers = #tpu.dot_dimension_numbers<[1], [0], [0], [1], [0, 0, 1, 1], [], []>} : vector<8x32xf32>, vector<32x100xf32>, vector<8x100xf32> -> vector<8x100xf32>
    %cst_3 = arith.constant dense<0xFF800000> : vector<8xf32>
    %3 = vector.multi_reduction <maximumf>, %2, %cst_3 [1] : vector<8x100xf32> to vector<8xf32>
    %4 = vector.shape_cast %3 : vector<8xf32> to vector<8x1xf32>
    %5 = vector.broadcast %4 : vector<8x1xf32> to vector<8x100xf32>
    %6 = arith.subf %2, %5 : vector<8x100xf32>
    %7 = math.exp %6 : vector<8x100xf32>
    %cst_4 = arith.constant dense<0.000000e+00> : vector<8xf32>
    %8 = vector.multi_reduction <add>, %7, %cst_4 [1] : vector<8x100xf32> to vector<8xf32>
    %9 = vector.shape_cast %8 : vector<8xf32> to vector<8x1xf32>
    %10 = tpu.reciprocal %9 : vector<8x1xf32> -> vector<8x1xf32>
    %11 = vector.broadcast %10 : vector<8x1xf32> to vector<8x100xf32>
    %12 = arith.mulf %7, %11 : vector<8x100xf32>
    %c0_5 = arith.constant 0 : index
    %c0_6 = arith.constant 0 : index
    %13 = vector.load %arg3[%c0_5, %c0_6] : memref<100x128xf32, #tpu.memory_space<vmem>>, vector<100x128xf32>
    %cst_7 = arith.constant dense<0.000000e+00> : vector<8x128xf32>
    %14 = tpu.matmul %12, %13, %cst_7 {dimension_numbers = #tpu.dot_dimension_numbers<[1], [0], [0], [1], [0, 0, 1, 1], [], []>} : vector<8x100xf32>, vector<100x128xf32>, vector<8x128xf32> -> vector<8x128xf32>
    %c0_8 = arith.constant 0 : index
    %c0_9 = arith.constant 0 : index
    %15 = vector.load %arg4[%c0_8, %c0_9] : memref<8x128xf32, #tpu.memory_space<vmem>>, vector<8x128xf32>
    tpu.vector_store %arg4[%c0_8, %c0_9], %14 {strides = array<i32>} : memref<8x128xf32, #tpu.memory_space<vmem>>, vector<8x128xf32>,
    return
  }
  func.func @transform_0(%arg0: i32) -> (i32, i32) {
    %c0_i32 = arith.constant 0 : i32
    %c0_i32_0 = arith.constant 0 : i32
    return %arg0, %c0_i32 : i32, i32
  }
  func.func @transform_1(%arg0: i32) -> (i32, i32) {
    %c0_i32 = arith.constant 0 : i32
    %c0_i32_0 = arith.constant 0 : i32
    %c0_i32_1 = arith.constant 0 : i32
    return %c0_i32, %c0_i32_0 : i32, i32
  }
  func.func @transform_2(%arg0: i32) -> (i32, i32) {
    %c0_i32 = arith.constant 0 : i32
    %c0_i32_0 = arith.constant 0 : i32
    %c0_i32_1 = arith.constant 0 : i32
    return %c0_i32, %c0_i32_0 : i32, i32
  }
  func.func @transform_3(%arg0: i32) -> (i32, i32) {
    %c0_i32 = arith.constant 0 : i32
    %c0_i32_0 = arith.constant 0 : i32
    return %arg0, %c0_i32 : i32, i32
  }
}

</mosaic_0001>

<llo_original>
// kernel: tpu_custom_call.1
$region0: #{tpu_custom_call.1}
  #allocation0 [shape = 'u32[]', space=smem, size = 0x4, offset = 0x4, fixed_abs, tag = 'smem constant byte address 0x4 - core index']
  #allocation1 [shape = 'u32[144,128]{1,0:T(1,128)}', space=vmem, size = 0x12000, scoped, tag = 'internal scratch']
  %s0 = inlined_call_operand.hbm [shape: f32[8,32], index: 0, kind: input, shape index: {}]
  %s1 = inlined_call_operand.hbm [shape: f32[32,100], index: 1, kind: input, shape index: {}]
  %s2 = inlined_call_operand.hbm [shape: f32[100,128], index: 2, kind: input, shape index: {}]
  %s3 = inlined_call_operand.hbm [shape: f32[8,128], index: 3, kind: output, shape index: {}]
  %s4 = sld [smem:[#allocation0]]
  $region34: #{tpu_custom_call.1} parent=0
    _
  %s6 = ssub.s32 1, %s4
  %s7 = scalar_select 0, %s6, %s4
  $region1: #{tpu_custom_call.1} parent=0
    #allocation2 [shape = 'u8[4096]{0}', space=vmem, size = 0x1000, scoped, tag = 'input window, operand 0, single buffered']
    #allocation3 [shape = 's32[1]{0}', space=sflag, size = 0x4, scoped, tag = 'scoped memory for tpu_custom_call.1']
    #allocation4 [shape = 's32[1]{0}', space=sflag, size = 0x4, scoped, tag = 'scoped memory for tpu_custom_call.1']
    #allocation5 [shape = 'u8[16384]{0}', space=vmem, size = 0x4000, scoped, tag = 'input window, operand 1, single buffered']
    #allocation6 [shape = 's32[1]{0}', space=sflag, size = 0x4, scoped, tag = 'scoped memory for tpu_custom_call.1']
    #allocation7 [shape = 'u8[53248]{0}', space=vmem, size = 0xd000, scoped, tag = 'input window, operand 2, single buffered']
    #allocation8 [shape = 'u8[4096]{0}', space=vmem, size = 0x1000, scoped, tag = 'output window, operand 0, single buffered']
    %8 = vsyncpa [#allocation3], 0
    %9 = vsyncpa [#allocation6], 0
    %10 = vsyncpa [#allocation4], 0
    // Predicated region
    $region2: #{tpu_custom_call.1} parent=1 // pred_check
      _
    $region3: #{tpu_custom_call.1} parent=1 // pred_check_branch
      %12 = sbr.rel (0) target = $region5
    $region4: #{tpu_custom_call.1} parent=1 // pred_region
      %s14 = ssub.s32 128, 128
      %15 = vsyncadd [#allocation3], %s14
      %s17 = sshll.u32 [#allocation2], 4
      %s18 = int_to_ptr.vmem [resolvable:$true] %s17
      %20 = dma.hbm_to_vmem [thread:$0]  %s0, 128, %s18, [#allocation3]
    $region5: #{tpu_custom_call.1} parent=1 // pred_fallthru
      _
    // Predicated region
    $region6: #{tpu_custom_call.1} parent=1 // pred_check
      _
    $region7: #{tpu_custom_call.1} parent=1 // pred_check_branch
      %22 = sbr.rel (0) target = $region9
    $region8: #{tpu_custom_call.1} parent=1 // pred_region
      %s24 = ssub.s32 512, 512
      %25 = vsyncadd [#allocation6], %s24
      %s26 = sshll.u32 [#allocation5], 4
      %s27 = int_to_ptr.vmem [resolvable:$true] %s26
      %32 = dma.hbm_to_vmem [thread:$0]  %s1, 512, %s27, [#allocation6], 128, 128, 8
    $region9: #{tpu_custom_call.1} parent=1 // pred_fallthru
      _
    // Predicated region
    $region10: #{tpu_custom_call.1} parent=1 // pred_check
      _
    $region11: #{tpu_custom_call.1} parent=1 // pred_check_branch
      %34 = sbr.rel (0) target = $region13
    $region12: #{tpu_custom_call.1} parent=1 // pred_region
      %s36 = ssub.s32 1664, 1664
      %37 = vsyncadd [#allocation6], %s36
      %s38 = sshll.u32 [#allocation7], 4
      %s39 = int_to_ptr.vmem [resolvable:$true] %s38
      %44 = dma.hbm_to_vmem [thread:$0]  %s2, 1664, %s39, [#allocation6], 128, 128, 8
    $region13: #{tpu_custom_call.1} parent=1 // pred_fallthru
      _
    // Predicated region
    $region14: #{tpu_custom_call.1} parent=1 // pred_check
      _
    $region15: #{tpu_custom_call.1} parent=1 // pred_check_branch
      %46 = sbr.rel (0) target = $region17
    $region16: #{tpu_custom_call.1} parent=1 // pred_region
      %47 = dma.done [#allocation3], 128
    $region17: #{tpu_custom_call.1} parent=1 // pred_fallthru
      _
    // Predicated region
    $region18: #{tpu_custom_call.1} parent=1 // pred_check
      _
    $region19: #{tpu_custom_call.1} parent=1 // pred_check_branch
      %49 = sbr.rel (0) target = $region21
    $region20: #{tpu_custom_call.1} parent=1 // pred_region
      %50 = dma.done [#allocation6], 512
    $region21: #{tpu_custom_call.1} parent=1 // pred_fallthru
      _
    // Predicated region
    $region22: #{tpu_custom_call.1} parent=1 // pred_check
      _
    $region23: #{tpu_custom_call.1} parent=1 // pred_check_branch
      %52 = sbr.rel (0) target = $region25
    $region24: #{tpu_custom_call.1} parent=1 // pred_region
      %53 = dma.done [#allocation6], 1664
    $region25: #{tpu_custom_call.1} parent=1 // pred_fallthru
      _
    %v54 = vld [vmem:[#allocation2] sm:$0xff]
    %v55 = vld [vmem:[#allocation5] sm:$0xff]
    %v56 = vld [vmem:[#allocation5 + $0x8] sm:$0xff]
    %v57 = vld [vmem:[#allocation5 + $0x10] sm:$0xff]
    %v58 = vld [vmem:[#allocation5 + $0x18] sm:$0xff]
    %vm59 = vcmask 261120
    %v61 = vsel %vm59, %v54, 0
    %63 = vmatprep.subr.mxu0 0.0
    %64 = vmatpush1.msra.mxu0 0.0
    %65 = vmatprep.subr.mxu0 0.0
    %66 = vmatpush1.msra.mxu0 0.0
    %67 = vmatprep.subr.mxu0 0.0
    %68 = vmatpush1.msra.mxu0 0.0
    %69 = vmatprep.subr.mxu0 0.0
    %70 = vmatpush1.msra.mxu0 0.0
    %71 = vmatprep.subr.mxu0 0.0
    %72 = vmatpush1.msra.mxu0 0.0
    %73 = vmatprep.subr.mxu0 0.0
    %74 = vmatpush1.msra.mxu0 0.0
    %75 = vmatprep.subr.mxu0 0.0
    %76 = vmatpush1.msra.mxu0 0.0
    %77 = vmatprep.subr.mxu0 0.0
    %78 = vmatpush1.msra.mxu0 0.0
    %79 = vmatprep.subr.mxu0 0.0
    %80 = vmatpush1.msra.mxu0 0.0
    %81 = vmatprep.subr.mxu0 0.0
    %82 = vmatpush1.msra.mxu0 0.0
    %83 = vmatprep.subr.mxu0 0.0
    %84 = vmatpush1.msra.mxu0 0.0
    %85 = vmatprep.subr.mxu0 0.0
    %86 = vmatpush1.msra.mxu0 0.0
    %87 = vmatprep.subr.mxu0 0.0
    %88 = vmatpush1.msra.mxu0 %v58
    %89 = vmatprep.subr.mxu0 0.0
    %90 = vmatpush1.msra.mxu0 %v57
    %91 = vmatprep.subr.mxu0 0.0
    %92 = vmatpush1.msra.mxu0 %v56
    %93 = vmatprep.subr.mxu0 0.0
    %94 = vmatpush1.msra.mxu0 %v55
    %95 = vmatprep.subr.mxu0 0.0
    %96 = vmatpush2.msra.mxu0 0.0
    %97 = vmatprep.subr.mxu0 0.0
    %98 = vmatpush2.msra.mxu0 0.0
    %99 = vmatprep.subr.mxu0 0.0
    %100 = vmatpush2.msra.mxu0 0.0
    %101 = vmatprep.subr.mxu0 0.0
    %102 = vmatpush2.msra.mxu0 0.0
    %103 = vmatprep.subr.mxu0 0.0
    %104 = vmatpush2.msra.mxu0 0.0
    %105 = vmatprep.subr.mxu0 0.0
    %106 = vmatpush2.msra.mxu0 0.0
    %107 = vmatprep.subr.mxu0 0.0
    %108 = vmatpush2.msra.mxu0 0.0
    %109 = vmatprep.subr.mxu0 0.0
    %110 = vmatpush2.msra.mxu0 0.0
    %111 = vmatprep.subr.mxu0 0.0
    %112 = vmatpush2.msra.mxu0 0.0
    %113 = vmatprep.subr.mxu0 0.0
    %114 = vmatpush2.msra.mxu0 0.0
    %115 = vmatprep.subr.mxu0 0.0
    %116 = vmatpush2.msra.mxu0 0.0
    %117 = vmatprep.subr.mxu0 0.0
    %118 = vmatpush2.msra.mxu0 0.0
    %119 = vmatprep.subr.mxu0 0.0
    %120 = vmatpush2.msra.mxu0 0.0
    %121 = vmatprep.subr.mxu0 0.0
    %122 = vmatpush2.msra.mxu0 0.0
    %123 = vmatprep.subr.mxu0 0.0
    %124 = vmatpush2.msra.mxu0 0.0
    %125 = vmatprep.subr.mxu0 0.0
    %126 = vmatpush2.msra.mxu0 0.0
    %127 = vmatprep.mubr.f32.mxu0 0.0
    %128 = vmatmul.mubr.f32.gmra.mxu0 %v61
    %v129 = vpop.f32.mrf.mxu0
    %v130 = vadd.f32 0.0, %v129
    %v131 = vpop.f32.mrf.mxu0
    %132 = vdwg.mxu0
    %vm133 = vcmask 818176
    %v134 = vsel %vm133, %v130, -inf
    %135 = vmax.xlane.f32.xlu0 %v134
    %v136 = vpop.xlane.xlu0 %135
    %v137 = vsub.f32 %v130, %v136
    %v138 = vmul.f32 %v137, 1.442695
    %v139 = vpow.pop %v138
    %v140 = vsel %vm133, %v139, 0.0
    %141 = vadd.xlane.f32.xlu0 %v140
    %v142 = vpop.xlane.xlu0 %141
    %v143 = vrcp.pop %v142
    %v144 = vmul.f32 %v139, %v143
    %v145 = vld [vmem:[#allocation7] sm:$0xff]
    %v146 = vld [vmem:[#allocation7 + $0x8] sm:$0xff]
    %v147 = vld [vmem:[#allocation7 + $0x10] sm:$0xff]
    %v148 = vld [vmem:[#allocation7 + $0x18] sm:$0xff]
    %v149 = vld [vmem:[#allocation7 + $0x20] sm:$0xff]
    %v150 = vld [vmem:[#allocation7 + $0x28] sm:$0xff]
    %v151 = vld [vmem:[#allocation7 + $0x30] sm:$0xff]
    %v152 = vld [vmem:[#allocation7 + $0x38] sm:$0xff]
    %v153 = vld [vmem:[#allocation7 + $0x40] sm:$0xff]
    %v154 = vld [vmem:[#allocation7 + $0x48] sm:$0xff]
    %v155 = vld [vmem:[#allocation7 + $0x50] sm:$0xff]
    %v156 = vld [vmem:[#allocation7 + $0x58] sm:$0xff]
    %v157 = vld [vmem:[#allocation7 + $0x60] sm:$0xf]
    %v159 = vsel %vm133, %v144, 0
    %vm161 = vcmask 1043456
    %v163 = vsel %vm161, %v157, 0
    %165 = vmatprep.subr.mxu0 0.0
    %166 = vmatpush1.msra.mxu0 0.0
    %167 = vmatprep.subr.mxu0 0.0
    %168 = vmatpush1.msra.mxu0 0.0
    %169 = vmatprep.subr.mxu0 0.0
    %170 = vmatpush1.msra.mxu0 0.0
    %171 = vmatprep.subr.mxu0 0.0
    %172 = vmatpush1.msra.mxu0 %v163
    %173 = vmatprep.subr.mxu0 0.0
    %174 = vmatpush1.msra.mxu0 %v156
    %175 = vmatprep.subr.mxu0 0.0
    %176 = vmatpush1.msra.mxu0 %v155
    %177 = vmatprep.subr.mxu0 0.0
    %178 = vmatpush1.msra.mxu0 %v154
    %179 = vmatprep.subr.mxu0 0.0
    %180 = vmatpush1.msra.mxu0 %v153
    %181 = vmatprep.subr.mxu0 0.0
    %182 = vmatpush1.msra.mxu0 %v152
    %183 = vmatprep.subr.mxu0 0.0
    %184 = vmatpush1.msra.mxu0 %v151
    %185 = vmatprep.subr.mxu0 0.0
    %186 = vmatpush1.msra.mxu0 %v150
    %187 = vmatprep.subr.mxu0 0.0
    %188 = vmatpush1.msra.mxu0 %v149
    %189 = vmatprep.subr.mxu0 0.0
    %190 = vmatpush1.msra.mxu0 %v148
    %191 = vmatprep.subr.mxu0 0.0
    %192 = vmatpush1.msra.mxu0 %v147
    %193 = vmatprep.subr.mxu0 0.0
    %194 = vmatpush1.msra.mxu0 %v146
    %195 = vmatprep.subr.mxu0 0.0
    %196 = vmatpush1.msra.mxu0 %v145
    %197 = vmatprep.subr.mxu0 0.0
    %198 = vmatpush2.msra.mxu0 0.0
    %199 = vmatprep.subr.mxu0 0.0
    %200 = vmatpush2.msra.mxu0 0.0
    %201 = vmatprep.subr.mxu0 0.0
    %202 = vmatpush2.msra.mxu0 0.0
    %203 = vmatprep.subr.mxu0 0.0
    %204 = vmatpush2.msra.mxu0 0.0
    %205 = vmatprep.subr.mxu0 0.0
    %206 = vmatpush2.msra.mxu0 0.0
    %207 = vmatprep.subr.mxu0 0.0
    %208 = vmatpush2.msra.mxu0 0.0
    %209 = vmatprep.subr.mxu0 0.0
    %210 = vmatpush2.msra.mxu0 0.0
    %211 = vmatprep.subr.mxu0 0.0
    %212 = vmatpush2.msra.mxu0 0.0
    %213 = vmatprep.subr.mxu0 0.0
    %214 = vmatpush2.msra.mxu0 0.0
    %215 = vmatprep.subr.mxu0 0.0
    %216 = vmatpush2.msra.mxu0 0.0
    %217 = vmatprep.subr.mxu0 0.0
    %218 = vmatpush2.msra.mxu0 0.0
    %219 = vmatprep.subr.mxu0 0.0
    %220 = vmatpush2.msra.mxu0 0.0
    %221 = vmatprep.subr.mxu0 0.0
    %222 = vmatpush2.msra.mxu0 0.0
    %223 = vmatprep.subr.mxu0 0.0
    %224 = vmatpush2.msra.mxu0 0.0
    %225 = vmatprep.subr.mxu0 0.0
    %226 = vmatpush2.msra.mxu0 0.0
    %227 = vmatprep.subr.mxu0 0.0
    %228 = vmatpush2.msra.mxu0 0.0
    %229 = vmatprep.mubr.f32.mxu0 0.0
    %230 = vmatmul.mubr.f32.gmra.mxu0 %v159
    %v231 = vpop.f32.mrf.mxu0
    %v232 = vadd.f32 0.0, %v231
    %v233 = vpop.f32.mrf.mxu0
    %234 = vdwg.mxu0
    %235 = vst [vmem:[#allocation8] sm:$0xff] %v232
    // Predicated region
    $region26: #{tpu_custom_call.1} parent=1 // pred_check
      _
    $region27: #{tpu_custom_call.1} parent=1 // pred_check_branch
      %237 = sbr.rel (0) target = $region29
    $region28: #{tpu_custom_call.1} parent=1 // pred_region
      %s239 = ssub.s32 128, 128
      %240 = vsyncadd [#allocation4], %s239
      %s242 = sshll.u32 [#allocation8], 4
      %s243 = int_to_ptr.vmem [resolvable:$true] %s242
      %245 = dma.vmem_to_hbm [thread:$0]  %s243, 128, %s3, [#allocation4]
    $region29: #{tpu_custom_call.1} parent=1 // pred_fallthru
      _
    // Predicated region
    $region30: #{tpu_custom_call.1} parent=1 // pred_check
      _
    $region31: #{tpu_custom_call.1} parent=1 // pred_check_branch
      %247 = sbr.rel (0) target = $region33
    $region32: #{tpu_custom_call.1} parent=1 // pred_region
      %248 = dma.done [#allocation4], 128
    $region33: #{tpu_custom_call.1} parent=1 // pred_fallthru
      _
    %249 = vsyncpa [#allocation3], 1
    %250 = vsyncpa [#allocation6], 1
    %251 = vsyncpa [#allocation4], 1

</llo_original>
